<compile_context>
chip_gen: v5e
topology: v5e:2x2
jax: 0.10.0
libtpu: 0.0.40
codegen_flags: <defaults>
</compile_context>

<pallas_src>
import functools

import jax
import jax.numpy as jnp
from jax.experimental import pallas as pl
from jax.experimental.pallas import tpu as pltpu


def _pool3_along(x, axis):
    """Stride-1 'same' 3-wide window max along `axis` via edge-clamped shifts.

    Edge-clamping is equivalent to the implicit -inf padding of
    nn.MaxPool2d(k=3, s=1, p=1): the replicated edge value is already inside
    the window, so it never changes the max.
    """
    n = x.shape[axis]
    if n == 1:
        return x
    sl = functools.partial(jax.lax.slice_in_dim, x, axis=axis)
    prev = jnp.concatenate([sl(0, 1), sl(0, n - 1)], axis=axis)   # x[i-1], clamped
    nxt = jnp.concatenate([sl(1, n), sl(n - 1, n)], axis=axis)    # x[i+1], clamped
    return jnp.maximum(x, jnp.maximum(prev, nxt))


def _pool3x3(x):
    """3x3, stride-1, 'same' max pool of a (cb, H, W) block (separable)."""
    return _pool3_along(_pool3_along(x, axis=2), axis=1)


def _spp_kernel(x_ref, o_ref, m1_ref, m2_ref, m3_ref):
    # x_ref: (cb, H, W) channel block of the current batch element
    # o_ref: (1, H, W) output block (resident across the channel grid axis)
    # m*_ref: (H, W) f32 running channel-max accumulators (VMEM scratch)
    c = pl.program_id(1)
    last_c = pl.num_programs(1) - 1

    x = x_ref[...].astype(jnp.float32)            # (cb, H, W)

    t1 = jnp.max(jnp.abs(x), axis=0)              # (H, W)
    p3 = _pool3x3(x)                              # MaxPool2d(3, 1, 1)
    t2 = jnp.max(jnp.abs(p3), axis=0)
    p5 = _pool3x3(p3)                             # MaxPool2d(5, 1, 2) == 3x3 twice
    t3 = jnp.max(jnp.abs(p5), axis=0)

    @pl.when(c == 0)
    def _():
        m1_ref[...] = t1
        m2_ref[...] = t2
        m3_ref[...] = t3

    @pl.when(c > 0)
    def _():
        m1_ref[...] = jnp.maximum(m1_ref[...], t1)
        m2_ref[...] = jnp.maximum(m2_ref[...], t2)
        m3_ref[...] = jnp.maximum(m3_ref[...], t3)

    @pl.when(c == last_c)
    def _():
        y = m1_ref[...] + m2_ref[...] + m3_ref[...]
        o_ref[...] = y[None].astype(o_ref.dtype)


def _pick_channel_block(C, H, W, itemsize, target_bytes=2 << 20):
    """Largest divisor of C whose (cb, H, W) block stays under ~target_bytes."""
    cap = max(1, target_bytes // max(1, H * W * itemsize))
    cap = min(C, cap)
    for cb in range(cap, 0, -1):
        if C % cb == 0:
            return cb
    return 1


@jax.jit
def spp_layer(x):
    """x: (N, C, H, W) -> (N, 1, H, W); same semantics as SPPLayer.forward."""
    N, C, H, W = x.shape
    cb = _pick_channel_block(C, H, W, jnp.dtype(x.dtype).itemsize)
    nc = C // cb

    return pl.pallas_call(
        _spp_kernel,
        out_shape=jax.ShapeDtypeStruct((N, 1, H, W), x.dtype),
        grid_spec=pltpu.PrefetchScalarGridSpec(
            num_scalar_prefetch=0,
            grid=(N, nc),                           # channel (reduction) axis last
            in_specs=[
                pl.BlockSpec((pl.Squeezed(), cb, H, W),
                             lambda n, c: (n, c, 0, 0)),
            ],
            out_specs=pl.BlockSpec((pl.Squeezed(), 1, H, W),
                                   lambda n, c: (n, 0, 0, 0)),
            scratch_shapes=[pltpu.VMEM((H, W), jnp.float32)] * 3,
        ),
        compiler_params=pltpu.CompilerParams(
            dimension_semantics=("parallel", "arbitrary"),
            vmem_limit_bytes=32 * 1024 * 1024,
        ),
    )(x)


def _spp_reference(x):
    """Pure-JAX reference mirroring the PyTorch module."""
    def pool(x, k, pad):
        return jax.lax.reduce_window(
            x, -jnp.inf, jax.lax.max,
            window_dimensions=(1, 1, k, k),
            window_strides=(1, 1, 1, 1),
            padding=((0, 0), (0, 0), (pad, pad), (pad, pad)),
        )
    y1 = jnp.max(jnp.abs(x), axis=1, keepdims=True)
    y2 = jnp.max(jnp.abs(pool(x, 3, 1)), axis=1, keepdims=True)
    y3 = jnp.max(jnp.abs(pool(x, 5, 2)), axis=1, keepdims=True)
    return y1 + y2 + y3


if __name__ == "__main__":
    key = jax.random.PRNGKey(0)
    N, C, H, W = 2, 4, 16, 16
    x = jax.random.normal(key, (N, C, H, W), dtype=jnp.float32)

    out = spp_layer(x)
    out = jax.block_until_ready(out)

    ref = _spp_reference(x)
    assert out.shape == (N, 1, H, W)
    assert jnp.allclose(out, ref, atol=1e-6, rtol=1e-6)

    print("KERNEL_OK")
</pallas_src>

<mosaic_0001>
module attributes {stable_mosaic.version = 11 : i64} {
  func.func @_spp_kernel(%arg0: i32, %arg1: i32, %arg2: memref<1x4x16x16xf32, #tpu.memory_space<vmem>>, %arg3: memref<1x1x16x16xf32, #tpu.memory_space<vmem>>, %arg4: memref<16x16xf32, #tpu.memory_space<vmem>>, %arg5: memref<16x16xf32, #tpu.memory_space<vmem>>, %arg6: memref<16x16xf32, #tpu.memory_space<vmem>>) attributes {dimension_semantics = [#tpu.dimension_semantics<parallel>, #tpu.dimension_semantics<arbitrary>], iteration_bounds = array<i64: 2, 1>, scalar_prefetch = 0 : i64, scratch_operands = 3 : i64, tpu.core_type = #tpu.core_type<tc>, window_params = [{transform_indices = @transform_0, window_bounds = array<i64: 1, 4, 16, 16>}, {transform_indices = @transform_1, window_bounds = array<i64: 1, 1, 16, 16>}]} {
    %c0 = arith.constant 0 : index
    %c0_0 = arith.constant 0 : index
    %c0_1 = arith.constant 0 : index
    %c0_2 = arith.constant 0 : index
    %0 = vector.load %arg2[%c0, %c0_0, %c0_1, %c0_2] : memref<1x4x16x16xf32, #tpu.memory_space<vmem>>, vector<1x4x16x16xf32>
    %1 = vector.shape_cast %0 : vector<1x4x16x16xf32> to vector<4x16x16xf32>
    %2 = math.absf %1 : vector<4x16x16xf32>
    %cst = arith.constant dense<0xFF800000> : vector<16x16xf32>
    %3 = vector.multi_reduction <maximumf>, %2, %cst [0] : vector<4x16x16xf32> to vector<16x16xf32>
    %4 = vector.extract_strided_slice %1 {offsets = [0, 0, 0], sizes = [4, 16, 1], strides = [1, 1, 1]} : vector<4x16x16xf32> to vector<4x16x1xf32>
    %5 = vector.extract_strided_slice %1 {offsets = [0, 0, 0], sizes = [4, 16, 15], strides = [1, 1, 1]} : vector<4x16x16xf32> to vector<4x16x15xf32>
    %6 = tpu.concatenate %4, %5 in 2 : vector<4x16x1xf32>, vector<4x16x15xf32> -> vector<4x16x16xf32>
    %7 = vector.extract_strided_slice %1 {offsets = [0, 0, 1], sizes = [4, 16, 15], strides = [1, 1, 1]} : vector<4x16x16xf32> to vector<4x16x15xf32>
    %8 = vector.extract_strided_slice %1 {offsets = [0, 0, 15], sizes = [4, 16, 1], strides = [1, 1, 1]} : vector<4x16x16xf32> to vector<4x16x1xf32>
    %9 = tpu.concatenate %7, %8 in 2 : vector<4x16x15xf32>, vector<4x16x1xf32> -> vector<4x16x16xf32>
    %10 = arith.maximumf %6, %9 : vector<4x16x16xf32>
    %11 = arith.maximumf %1, %10 : vector<4x16x16xf32>
    %12 = vector.extract_strided_slice %11 {offsets = [0, 0, 0], sizes = [4, 1, 16], strides = [1, 1, 1]} : vector<4x16x16xf32> to vector<4x1x16xf32>
    %13 = vector.extract_strided_slice %11 {offsets = [0, 0, 0], sizes = [4, 15, 16], strides = [1, 1, 1]} : vector<4x16x16xf32> to vector<4x15x16xf32>
    %14 = tpu.concatenate %12, %13 in 1 : vector<4x1x16xf32>, vector<4x15x16xf32> -> vector<4x16x16xf32>
    %15 = vector.extract_strided_slice %11 {offsets = [0, 1, 0], sizes = [4, 15, 16], strides = [1, 1, 1]} : vector<4x16x16xf32> to vector<4x15x16xf32>
    %16 = vector.extract_strided_slice %11 {offsets = [0, 15, 0], sizes = [4, 1, 16], strides = [1, 1, 1]} : vector<4x16x16xf32> to vector<4x1x16xf32>
    %17 = tpu.concatenate %15, %16 in 1 : vector<4x15x16xf32>, vector<4x1x16xf32> -> vector<4x16x16xf32>
    %18 = arith.maximumf %14, %17 : vector<4x16x16xf32>
    %19 = arith.maximumf %11, %18 : vector<4x16x16xf32>
    %20 = math.absf %19 : vector<4x16x16xf32>
    %cst_3 = arith.constant dense<0xFF800000> : vector<16x16xf32>
    %21 = vector.multi_reduction <maximumf>, %20, %cst_3 [0] : vector<4x16x16xf32> to vector<16x16xf32>
    %22 = vector.extract_strided_slice %19 {offsets = [0, 0, 0], sizes = [4, 16, 1], strides = [1, 1, 1]} : vector<4x16x16xf32> to vector<4x16x1xf32>
    %23 = vector.extract_strided_slice %19 {offsets = [0, 0, 0], sizes = [4, 16, 15], strides = [1, 1, 1]} : vector<4x16x16xf32> to vector<4x16x15xf32>
    %24 = tpu.concatenate %22, %23 in 2 : vector<4x16x1xf32>, vector<4x16x15xf32> -> vector<4x16x16xf32>
    %25 = vector.extract_strided_slice %19 {offsets = [0, 0, 1], sizes = [4, 16, 15], strides = [1, 1, 1]} : vector<4x16x16xf32> to vector<4x16x15xf32>
    %26 = vector.extract_strided_slice %19 {offsets = [0, 0, 15], sizes = [4, 16, 1], strides = [1, 1, 1]} : vector<4x16x16xf32> to vector<4x16x1xf32>
    %27 = tpu.concatenate %25, %26 in 2 : vector<4x16x15xf32>, vector<4x16x1xf32> -> vector<4x16x16xf32>
    %28 = arith.maximumf %24, %27 : vector<4x16x16xf32>
    %29 = arith.maximumf %19, %28 : vector<4x16x16xf32>
    %30 = vector.extract_strided_slice %29 {offsets = [0, 0, 0], sizes = [4, 1, 16], strides = [1, 1, 1]} : vector<4x16x16xf32> to vector<4x1x16xf32>
    %31 = vector.extract_strided_slice %29 {offsets = [0, 0, 0], sizes = [4, 15, 16], strides = [1, 1, 1]} : vector<4x16x16xf32> to vector<4x15x16xf32>
    %32 = tpu.concatenate %30, %31 in 1 : vector<4x1x16xf32>, vector<4x15x16xf32> -> vector<4x16x16xf32>
    %33 = vector.extract_strided_slice %29 {offsets = [0, 1, 0], sizes = [4, 15, 16], strides = [1, 1, 1]} : vector<4x16x16xf32> to vector<4x15x16xf32>
    %34 = vector.extract_strided_slice %29 {offsets = [0, 15, 0], sizes = [4, 1, 16], strides = [1, 1, 1]} : vector<4x16x16xf32> to vector<4x1x16xf32>
    %35 = tpu.concatenate %33, %34 in 1 : vector<4x15x16xf32>, vector<4x1x16xf32> -> vector<4x16x16xf32>
    %36 = arith.maximumf %32, %35 : vector<4x16x16xf32>
    %37 = arith.maximumf %29, %36 : vector<4x16x16xf32>
    %38 = math.absf %37 : vector<4x16x16xf32>
    %cst_4 = arith.constant dense<0xFF800000> : vector<16x16xf32>
    %39 = vector.multi_reduction <maximumf>, %38, %cst_4 [0] : vector<4x16x16xf32> to vector<16x16xf32>
    %c0_i32 = arith.constant 0 : i32
    %40 = arith.cmpi eq, %arg1, %c0_i32 : i32
    %41 = arith.extui %40 : i1 to i32
    %c0_i32_5 = arith.constant 0 : i32
    %42 = arith.cmpi ne, %41, %c0_i32_5 : i32
    scf.if %42 {
      %c0_10 = arith.constant 0 : index
      %c0_11 = arith.constant 0 : index
      %49 = vector.load %arg4[%c0_10, %c0_11] : memref<16x16xf32, #tpu.memory_space<vmem>>, vector<16x16xf32>
      tpu.vector_store %arg4[%c0_10, %c0_11], %3 {strides = array<i32>} : memref<16x16xf32, #tpu.memory_space<vmem>>, vector<16x16xf32>,
      %c0_12 = arith.constant 0 : index
      %c0_13 = arith.constant 0 : index
      %50 = vector.load %arg5[%c0_12, %c0_13] : memref<16x16xf32, #tpu.memory_space<vmem>>, vector<16x16xf32>
      tpu.vector_store %arg5[%c0_12, %c0_13], %21 {strides = array<i32>} : memref<16x16xf32, #tpu.memory_space<vmem>>, vector<16x16xf32>,
      %c0_14 = arith.constant 0 : index
      %c0_15 = arith.constant 0 : index
      %51 = vector.load %arg6[%c0_14, %c0_15] : memref<16x16xf32, #tpu.memory_space<vmem>>, vector<16x16xf32>
      tpu.vector_store %arg6[%c0_14, %c0_15], %39 {strides = array<i32>} : memref<16x16xf32, #tpu.memory_space<vmem>>, vector<16x16xf32>,
    } else {
    }
    %c0_i32_6 = arith.constant 0 : i32
    %43 = arith.cmpi sgt, %arg1, %c0_i32_6 : i32
    %44 = arith.extui %43 : i1 to i32
    %c0_i32_7 = arith.constant 0 : i32
    %45 = arith.cmpi ne, %44, %c0_i32_7 : i32
    scf.if %45 {
      %c0_10 = arith.constant 0 : index
      %c0_11 = arith.constant 0 : index
      %49 = vector.load %arg4[%c0_10, %c0_11] : memref<16x16xf32, #tpu.memory_space<vmem>>, vector<16x16xf32>
      %50 = arith.maximumf %49, %3 : vector<16x16xf32>
      %c0_12 = arith.constant 0 : index
      %c0_13 = arith.constant 0 : index
      %51 = vector.load %arg4[%c0_12, %c0_13] : memref<16x16xf32, #tpu.memory_space<vmem>>, vector<16x16xf32>
      tpu.vector_store %arg4[%c0_12, %c0_13], %50 {strides = array<i32>} : memref<16x16xf32, #tpu.memory_space<vmem>>, vector<16x16xf32>,
      %c0_14 = arith.constant 0 : index
      %c0_15 = arith.constant 0 : index
      %52 = vector.load %arg5[%c0_14, %c0_15] : memref<16x16xf32, #tpu.memory_space<vmem>>, vector<16x16xf32>
      %53 = arith.maximumf %52, %21 : vector<16x16xf32>
      %c0_16 = arith.constant 0 : index
      %c0_17 = arith.constant 0 : index
      %54 = vector.load %arg5[%c0_16, %c0_17] : memref<16x16xf32, #tpu.memory_space<vmem>>, vector<16x16xf32>
      tpu.vector_store %arg5[%c0_16, %c0_17], %53 {strides = array<i32>} : memref<16x16xf32, #tpu.memory_space<vmem>>, vector<16x16xf32>,
      %c0_18 = arith.constant 0 : index
      %c0_19 = arith.constant 0 : index
      %55 = vector.load %arg6[%c0_18, %c0_19] : memref<16x16xf32, #tpu.memory_space<vmem>>, vector<16x16xf32>
      %56 = arith.maximumf %55, %39 : vector<16x16xf32>
      %c0_20 = arith.constant 0 : index
      %c0_21 = arith.constant 0 : index
      %57 = vector.load %arg6[%c0_20, %c0_21] : memref<16x16xf32, #tpu.memory_space<vmem>>, vector<16x16xf32>
      tpu.vector_store %arg6[%c0_20, %c0_21], %56 {strides = array<i32>} : memref<16x16xf32, #tpu.memory_space<vmem>>, vector<16x16xf32>,
    } else {
    }
    %c0_i32_8 = arith.constant 0 : i32
    %46 = arith.cmpi eq, %arg1, %c0_i32_8 : i32
    %47 = arith.extui %46 : i1 to i32
    %c0_i32_9 = arith.constant 0 : i32
    %48 = arith.cmpi ne, %47, %c0_i32_9 : i32
    scf.if %48 {
      %c0_10 = arith.constant 0 : index
      %c0_11 = arith.constant 0 : index
      %49 = vector.load %arg4[%c0_10, %c0_11] : memref<16x16xf32, #tpu.memory_space<vmem>>, vector<16x16xf32>
      %c0_12 = arith.constant 0 : index
      %c0_13 = arith.constant 0 : index
      %50 = vector.load %arg5[%c0_12, %c0_13] : memref<16x16xf32, #tpu.memory_space<vmem>>, vector<16x16xf32>
      %51 = arith.addf %49, %50 : vector<16x16xf32>
      %c0_14 = arith.constant 0 : index
      %c0_15 = arith.constant 0 : index
      %52 = vector.load %arg6[%c0_14, %c0_15] : memref<16x16xf32, #tpu.memory_space<vmem>>, vector<16x16xf32>
      %53 = arith.addf %51, %52 : vector<16x16xf32>
      %54 = vector.shape_cast %53 : vector<16x16xf32> to vector<1x16x16xf32>
      %c0_16 = arith.constant 0 : index
      %c0_17 = arith.constant 0 : index
      %c0_18 = arith.constant 0 : index
      %c0_19 = arith.constant 0 : index
      %55 = vector.load %arg3[%c0_16, %c0_17, %c0_18, %c0_19] : memref<1x1x16x16xf32, #tpu.memory_space<vmem>>, vector<1x1x16x16xf32>
      %56 = vector.shape_cast %55 : vector<1x1x16x16xf32> to vector<1x16x16xf32>
      %57 = vector.shape_cast %54 : vector<1x16x16xf32> to vector<1x1x16x16xf32>
      tpu.vector_store %arg3[%c0_16, %c0_17, %c0_18, %c0_19], %57 {strides = array<i32>} : memref<1x1x16x16xf32, #tpu.memory_space<vmem>>, vector<1x1x16x16xf32>,
    } else {
    }
    return
  }
  func.func @transform_0(%arg0: i32, %arg1: i32) -> (i32, i32, i32, i32) {
    %c0_i32 = arith.constant 0 : i32
    %c0_i32_0 = arith.constant 0 : i32
    %c0_i32_1 = arith.constant 0 : i32
    return %arg0, %arg1, %c0_i32, %c0_i32_0 : i32, i32, i32, i32
  }
  func.func @transform_1(%arg0: i32, %arg1: i32) -> (i32, i32, i32, i32) {
    %c0_i32 = arith.constant 0 : i32
    %c0_i32_0 = arith.constant 0 : i32
    %c0_i32_1 = arith.constant 0 : i32
    %c0_i32_2 = arith.constant 0 : i32
    return %arg0, %c0_i32, %c0_i32_0, %c0_i32_1 : i32, i32, i32, i32
  }
}

</mosaic_0001>

<llo_original>
// kernel: spp_layer.1
$region0: #{spp_layer.1}
  #allocation0 [shape = 'u32[]', space=smem, size = 0x4, offset = 0x4, fixed_abs, tag = 'smem constant byte address 0x4 - core index']
  #allocation1 [shape = 'u32[72,128]{1,0:T(1,128)}', space=vmem, size = 0x9000, scoped, tag = 'internal scratch']
  #allocation2 [shape = 'f32[16,16]{1,0:T(8,128)}', space=vmem, size = 0x2000, scoped, tag = 'scratch operand']
  #allocation3 [shape = 'f32[16,16]{1,0:T(8,128)}', space=vmem, size = 0x2000, scoped, tag = 'scratch operand']
  #allocation4 [shape = 'f32[16,16]{1,0:T(8,128)}', space=vmem, size = 0x2000, scoped, tag = 'scratch operand']
  %s0 = inlined_call_operand.hbm [shape: f32[2,4,16,16], index: 0, kind: input, shape index: {}]
  %s1 = inlined_call_operand.hbm [shape: f32[2,1,16,16], index: 1, kind: output, shape index: {}]
  %s2 = sld [smem:[#allocation0]]
  $region53: #{spp_layer.1} parent=0
    _
  %s4 = ssub.s32 1, %s2
  %s5 = scalar_select 0, %s4, %s2
  $region1: #{spp_layer.1} parent=0
    #allocation5 [shape = 'u8[65536]{0}', space=vmem, size = 0x10000, scoped, tag = 'input window, operand 0']
    #allocation6 [shape = 's32[2]{0}', space=sflag, size = 0x8, scoped, tag = 'scoped memory for spp_layer.1']
    #allocation7 [shape = 's32[2]{0}', space=sflag, size = 0x8, scoped, tag = 'scoped memory for spp_layer.1']
    #allocation8 [shape = 'u8[16384]{0}', space=vmem, size = 0x4000, scoped, tag = 'output window, operand 0']
    %6 = vsyncpa [#allocation6], 0
    %s7 = scalar_lea.sflag [#allocation6], 1
    %8 = vsyncpa %s7, 0
    %9 = vsyncpa [#allocation7], 0
    %s10 = scalar_lea.sflag [#allocation7], 1
    %11 = vsyncpa %s10, 0
    loop: start=0, step=1, limit=4
    $region2: #{spp_layer.1} parent=1 // loop_pre_header
      _
    $region3: #{spp_layer.1} parent=1 // loop_header
      %s13 = sphi 0, %s17
      %p14 = scmp.ge.s32.totalorder %s13, 4
      %s20 = sphi 0, %s32
      %s21 = sphi 0, %s28
      %s22 = sphi 0, %s20
      %s23 = sphi 0, %s21
      %s24 = sphi 0, %s22
      %s25 = sphi 0, %s23
      %s37 = sphi 0, %s39
      %s40 = sphi 0, %s37
      %s41 = sphi 0, %s40
      %s57 = sphi 0, %s41
      %s63 = sphi 0, %s65
      %s66 = sphi 0, %s63
      %s67 = sphi 0, %s66
      %s83 = sphi 0, %s67
    $region4: #{spp_layer.1} parent=1 // loop_header_branch
      %16 = sbr.rel (%p14) target = $region8
    $region5: #{spp_layer.1} parent=1 // loop_body
      %s18 = ssub.s32 %s13, 1
      %s19 = ssub.s32 %s13, 2
      %s26 = sadd.s32 1, %s21
      %p27 = scmp.ge.s32.totalorder %s26, 1
      %s28 = scalar_select %p27, 0, %s26
      %s29 = sadd.s32 1, %s20
      %s30 = scalar_select %p27, %s29, %s20
      %p31 = scmp.ge.s32.totalorder %s30, 2
      %s32 = scalar_select %p31, 0, %s30
      %s33 = ssub.s32 %s20, %s32
      %s34 = ssub.s32 %s21, %s28
      %s35 = sor.u32 %s33, %s34
      %p36 = scmp.eq.s32.totalorder %s35, 0
      %s38 = sadd.s32 %s37, 1
      %s39 = scalar_select %p36, %s37, %s38
      %p42 = pneg %p36
      %p43 = scmp.eq.s32.totalorder %s13, 1
      %p44 = por %p42, %p43
      %p45 = scmp.ne.s32.totalorder %s37, %s40
      %p46 = scmp.eq.s32.totalorder %s13, 0
      %p47 = por %p45, %p46
      %p48 = scmp.ne.s32.totalorder %s37, %s40
      %p49 = scmp.eq.s32.totalorder %s18, 1
      %p50 = por %p48, %p49
      %p51 = scmp.ne.s32.totalorder %s40, %s41
      %p52 = scmp.eq.s32.totalorder %s18, 0
      %p53 = por %p51, %p52
      %p54 = scmp.ne.s32.totalorder %s40, %s41
      %p55 = scmp.eq.s32.totalorder %s19, 1
      %p56 = por %p54, %p55
      %p58 = scmp.ne.s32.totalorder %s41, %s57
      %p59 = scmp.eq.s32.totalorder %s19, 0
      %p60 = por %p58, %p59
      %s61 = ssub.s32 %s20, %s32
      %p62 = scmp.eq.s32.totalorder %s61, 0
      %s64 = sadd.s32 %s63, 1
      %s65 = scalar_select %p62, %s63, %s64
      %p68 = pneg %p62
      %p69 = scmp.eq.s32.totalorder %s13, 1
      %p70 = por %p68, %p69
      %p71 = scmp.ne.s32.totalorder %s63, %s66
      %p72 = scmp.eq.s32.totalorder %s13, 0
      %p73 = por %p71, %p72
      %p74 = scmp.ne.s32.totalorder %s63, %s66
      %p75 = scmp.eq.s32.totalorder %s18, 1
      %p76 = por %p74, %p75
      %p77 = scmp.ne.s32.totalorder %s66, %s67
      %p78 = scmp.eq.s32.totalorder %s18, 0
      %p79 = por %p77, %p78
      %p80 = scmp.ne.s32.totalorder %s66, %s67
      %p81 = scmp.eq.s32.totalorder %s19, 1
      %p82 = por %p80, %p81
      %p84 = scmp.ne.s32.totalorder %s67, %s83
      %p85 = scmp.eq.s32.totalorder %s19, 0
      %p86 = por %p84, %p85
      %p87 = scmp.le.s32.totalorder 1, %s13
      %p88 = scmp.lt.s32.totalorder %s13, 3
      %p89 = pnand %p87, %p88
      %p90 = pneg %p89
      // Predicated region
      $region9: #{spp_layer.1} parent=5 // pred_check
        _
      $region10: #{spp_layer.1} parent=5 // pred_check_branch
        %92 = sbr.rel (%p89) target = $region12
      $region11: #{spp_layer.1} parent=5 // pred_region
        %s93 = ssub.s32 %s13, 1
      $region12: #{spp_layer.1} parent=5 // pred_fallthru
        _
      %p94 = scmp.lt.s32.totalorder %s13, 2
      // Predicated region
      $region13: #{spp_layer.1} parent=5 // pred_check
        %p95 = pneg %p94
      $region14: #{spp_layer.1} parent=5 // pred_check_branch
        %97 = sbr.rel (%p95) target = $region16
      $region15: #{spp_layer.1} parent=5 // pred_region
        // Predicated region
        $region17: #{spp_layer.1} parent=15 // pred_check
          %p98 = pneg %p47
        $region18: #{spp_layer.1} parent=15 // pred_check_branch
          %100 = sbr.rel (%p98) target = $region20
        $region19: #{spp_layer.1} parent=15 // pred_region
          %s101 = sand.u32 %s37, 1
          %s102 = scalar_lea.sflag [#allocation6], %s101
          %s103 = sand.u32 %s37, 1
          %s104 = smul.addr %s103, 64
          %s105 = scalar_lea.vmem [#allocation5], %s104
          %s106 = smul.u32 4, %s21
          %108 = vsyncadd %s102, 0
          %s109 = smul.addr %s106, 2
          %s110 = smul.addr %s20, 8
          %s111 = sadd.s32 %s109, %s110
          %s112 = smul.addr %s111, 8
          %s113 = scalar_lea.hbm %s0, %s112
          %s114 = sshll.u32 %s113, 4
          %s115 = int_to_ptr.hbm [resolvable:$true] %s114
          %s116 = sshll.u32 %s105, 4
          %s117 = int_to_ptr.vmem [resolvable:$true] %s116
          %122 = dma.hbm_to_vmem [thread:$0]  %s115, 1024, %s117, %s102, 128, 128, 8
        $region20: #{spp_layer.1} parent=15 // pred_fallthru
          _
      $region16: #{spp_layer.1} parent=5 // pred_fallthru
        _
      %p123 = scmp.le.s32.totalorder 1, %s13
      %p124 = scmp.lt.s32.totalorder %s13, 3
      %p125 = pnand %p123, %p124
      %p126 = pneg %p125
      // Predicated region
      $region21: #{spp_layer.1} parent=5 // pred_check
        _
      $region22: #{spp_layer.1} parent=5 // pred_check_branch
        %128 = sbr.rel (%p125) target = $region24
      $region23: #{spp_layer.1} parent=5 // pred_region
        %s129 = ssub.s32 %s13, 1
        %s130 = sand.u32 %s40, 1
        %s131 = scalar_lea.sflag [#allocation6], %s130
        %s132 = sand.u32 %s40, 1
        %s133 = smul.addr %s132, 64
        %s134 = scalar_lea.vmem [#allocation5], %s133
        // Predicated region
        $region25: #{spp_layer.1} parent=23 // pred_check
          %p135 = pneg %p53
        $region26: #{spp_layer.1} parent=23 // pred_check_branch
          %137 = sbr.rel (%p135) target = $region28
        $region27: #{spp_layer.1} parent=23 // pred_region
          %139 = dma.done %s131, 1024
        $region28: #{spp_layer.1} parent=23 // pred_fallthru
          _
        %s140 = sand.u32 %s40, 1
        %s141 = scalar_lea.sflag [#allocation6], %s140
        %s142 = sand.u32 %s40, 1
        %s143 = smul.addr %s142, 64
        %s144 = scalar_lea.vmem [#allocation5], %s143
        %p145 = pneg %p53
        %p146 = pneg %p50
        %p147 = pneg %p79
        %p148 = pneg %p76
        %s149 = sand.u32 %s66, 1
        %s150 = scalar_lea.sflag [#allocation7], %s149
        %s151 = sand.u32 %s66, 1
        %s152 = smul.addr %s151, 16
        %s153 = scalar_lea.vmem [#allocation8], %s152
        %s154 = smul.u32 4, %s23
        %v155 = vld [vmem:[%s134] sm:$0xff]
        %v156 = vld [vmem:[%s134 + $0x8] sm:$0xff]
        %v157 = vld [vmem:[%s134 + $0x10] sm:$0xff]
        %v158 = vld [vmem:[%s134 + $0x18] sm:$0xff]
        %v159 = vld [vmem:[%s134 + $0x20] sm:$0xff]
        %v160 = vld [vmem:[%s134 + $0x28] sm:$0xff]
        %v161 = vld [vmem:[%s134 + $0x30] sm:$0xff]
        %v162 = vld [vmem:[%s134 + $0x38] sm:$0xff]
        %v163 = vand.u32 2147483647, %v155
        %v164 = vand.u32 2147483647, %v156
        %v165 = vand.u32 2147483647, %v157
        %v166 = vand.u32 2147483647, %v158
        %v167 = vand.u32 2147483647, %v159
        %v168 = vand.u32 2147483647, %v160
        %v169 = vand.u32 2147483647, %v161
        %v170 = vand.u32 2147483647, %v162
        %vm171 = vcmask 130048
        %v172 = vsel %vm171, %v163, -inf
        %v173 = vsel %vm171, %v165, -inf
        %v174 = vsel %vm171, %v167, -inf
        %v175 = vmax.f32 %v172, %v174
        %v176 = vsel %vm171, %v169, -inf
        %v177 = vmax.f32 %v173, %v176
        %v178 = vmax.f32 %v175, %v177
        %v179 = vsel %vm171, %v164, -inf
        %v180 = vsel %vm171, %v166, -inf
        %v181 = vsel %vm171, %v168, -inf
        %v182 = vmax.f32 %v179, %v181
        %v183 = vsel %vm171, %v170, -inf
        %v184 = vmax.f32 %v180, %v183
        %v185 = vmax.f32 %v182, %v184
        %194 = vrot.lane.b32.xlu0 %v155, 1
        %v195 = vpop.permute.xlu0 %194
        %196 = vrot.lane.b32.xlu0 %v156, 1
        %v197 = vpop.permute.xlu0 %196
        %198 = vrot.lane.b32.xlu0 %v157, 1
        %v199 = vpop.permute.xlu0 %198
        %200 = vrot.lane.b32.xlu0 %v158, 1
        %v201 = vpop.permute.xlu0 %200
        %202 = vrot.lane.b32.xlu0 %v159, 1
        %v203 = vpop.permute.xlu0 %202
        %204 = vrot.lane.b32.xlu0 %v160, 1
        %v205 = vpop.permute.xlu0 %204
        %206 = vrot.lane.b32.xlu0 %v161, 1
        %v207 = vpop.permute.xlu0 %206
        %208 = vrot.lane.b32.xlu0 %v162, 1
        %v209 = vpop.permute.xlu0 %208
        %vm218 = vcmask 7168
        %v219 = vsel %vm218, %v155, %v195
        %v220 = vsel %vm218, %v156, %v197
        %v221 = vsel %vm218, %v157, %v199
        %v222 = vsel %vm218, %v158, %v201
        %v223 = vsel %vm218, %v159, %v203
        %v224 = vsel %vm218, %v160, %v205
        %v225 = vsel %vm218, %v161, %v207
        %v226 = vsel %vm218, %v162, %v209
        %227 = vrot.lane.b32.xlu0 %v155, 127
        %v228 = vpop.permute.xlu0 %227
        %229 = vrot.lane.b32.xlu0 %v156, 127
        %v230 = vpop.permute.xlu0 %229
        %231 = vrot.lane.b32.xlu0 %v157, 127
        %v232 = vpop.permute.xlu0 %231
        %233 = vrot.lane.b32.xlu0 %v158, 127
        %v234 = vpop.permute.xlu0 %233
        %235 = vrot.lane.b32.xlu0 %v159, 127
        %v236 = vpop.permute.xlu0 %235
        %237 = vrot.lane.b32.xlu0 %v160, 127
        %v238 = vpop.permute.xlu0 %237
        %239 = vrot.lane.b32.xlu0 %v161, 127
        %v240 = vpop.permute.xlu0 %239
        %241 = vrot.lane.b32.xlu0 %v162, 127
        %v242 = vpop.permute.xlu0 %241
        %vm251 = vcmask 121856
        %v252 = vsel %vm251, %v228, %v155
        %v253 = vsel %vm251, %v230, %v156
        %v254 = vsel %vm251, %v232, %v157
        %v255 = vsel %vm251, %v234, %v158
        %v256 = vsel %vm251, %v236, %v159
        %v257 = vsel %vm251, %v238, %v160
        %v258 = vsel %vm251, %v240, %v161
        %v259 = vsel %vm251, %v242, %v162
        %v260 = vmax.f32 %v219, %v252
        %v261 = vmax.f32 %v220, %v253
        %v262 = vmax.f32 %v221, %v254
        %v263 = vmax.f32 %v222, %v255
        %v264 = vmax.f32 %v223, %v256
        %v265 = vmax.f32 %v224, %v257
        %v266 = vmax.f32 %v225, %v258
        %v267 = vmax.f32 %v226, %v259
        %v268 = vmax.f32 %v155, %v260
        %v269 = vmax.f32 %v156, %v261
        %v270 = vmax.f32 %v157, %v262
        %v271 = vmax.f32 %v158, %v263
        %v272 = vmax.f32 %v159, %v264
        %v273 = vmax.f32 %v160, %v265
        %v274 = vmax.f32 %v161, %v266
        %v275 = vmax.f32 %v162, %v267
        %vm284 = vcmask 1040384
        %v285 = vrot.slane %v268, 7
        %v286 = vrot.slane %v269, 7
        %v287 = vsel %vm284, %v285, %v286
        %v288 = vrot.slane %v270, 7
        %v289 = vrot.slane %v271, 7
        %v290 = vsel %vm284, %v288, %v289
        %v291 = vrot.slane %v272, 7
        %v292 = vrot.slane %v273, 7
        %v293 = vsel %vm284, %v291, %v292
        %v294 = vrot.slane %v274, 7
        %v295 = vrot.slane %v275, 7
        %v296 = vsel %vm284, %v294, %v295
        %v305 = vsel %vm284, %v268, %v285
        %v306 = vsel %vm284, %v270, %v288
        %v307 = vsel %vm284, %v272, %v291
        %v308 = vsel %vm284, %v274, %v294
        %vm309 = vcmask 1046528
        %v310 = vrot.slane %v268, 1
        %v311 = vrot.slane %v269, 1
        %v312 = vsel %vm309, %v310, %v311
        %v313 = vrot.slane %v270, 1
        %v314 = vrot.slane %v271, 1
        %v315 = vsel %vm309, %v313, %v314
        %v316 = vrot.slane %v272, 1
        %v317 = vrot.slane %v273, 1
        %v318 = vsel %vm309, %v316, %v317
        %v319 = vrot.slane %v274, 1
        %v320 = vrot.slane %v275, 1
        %v321 = vsel %vm309, %v319, %v320
        %v330 = vsel %vm309, %v311, %v269
        %v331 = vsel %vm309, %v314, %v271
        %v332 = vsel %vm309, %v317, %v273
        %v333 = vsel %vm309, %v320, %v275
        %v334 = vmax.f32 %v305, %v312
        %v335 = vmax.f32 %v287, %v330
        %v336 = vmax.f32 %v306, %v315
        %v337 = vmax.f32 %v290, %v331
        %v338 = vmax.f32 %v307, %v318
        %v339 = vmax.f32 %v293, %v332
        %v340 = vmax.f32 %v308, %v321
        %v341 = vmax.f32 %v296, %v333
        %v342 = vmax.f32 %v268, %v334
        %v343 = vmax.f32 %v269, %v335
        %v344 = vmax.f32 %v270, %v336
        %v345 = vmax.f32 %v271, %v337
        %v346 = vmax.f32 %v272, %v338
        %v347 = vmax.f32 %v273, %v339
        %v348 = vmax.f32 %v274, %v340
        %v349 = vmax.f32 %v275, %v341
        %v350 = vand.u32 2147483647, %v342
        %v351 = vand.u32 2147483647, %v343
        %v352 = vand.u32 2147483647, %v344
        %v353 = vand.u32 2147483647, %v345
        %v354 = vand.u32 2147483647, %v346
        %v355 = vand.u32 2147483647, %v347
        %v356 = vand.u32 2147483647, %v348
        %v357 = vand.u32 2147483647, %v349
        %v358 = vsel %vm171, %v350, -inf
        %v359 = vsel %vm171, %v352, -inf
        %v360 = vsel %vm171, %v354, -inf
        %v361 = vmax.f32 %v358, %v360
        %v362 = vsel %vm171, %v356, -inf
        %v363 = vmax.f32 %v359, %v362
        %v364 = vmax.f32 %v361, %v363
        %v365 = vsel %vm171, %v351, -inf
        %v366 = vsel %vm171, %v353, -inf
        %v367 = vsel %vm171, %v355, -inf
        %v368 = vmax.f32 %v365, %v367
        %v369 = vsel %vm171, %v357, -inf
        %v370 = vmax.f32 %v366, %v369
        %v371 = vmax.f32 %v368, %v370
        %380 = vrot.lane.b32.xlu0 %v342, 1
        %v381 = vpop.permute.xlu0 %380
        %382 = vrot.lane.b32.xlu0 %v343, 1
        %v383 = vpop.permute.xlu0 %382
        %384 = vrot.lane.b32.xlu0 %v344, 1
        %v385 = vpop.permute.xlu0 %384
        %386 = vrot.lane.b32.xlu0 %v345, 1
        %v387 = vpop.permute.xlu0 %386
        %388 = vrot.lane.b32.xlu0 %v346, 1
        %v389 = vpop.permute.xlu0 %388
        %390 = vrot.lane.b32.xlu0 %v347, 1
        %v391 = vpop.permute.xlu0 %390
        %392 = vrot.lane.b32.xlu0 %v348, 1
        %v393 = vpop.permute.xlu0 %392
        %394 = vrot.lane.b32.xlu0 %v349, 1
        %v395 = vpop.permute.xlu0 %394
        %v404 = vsel %vm218, %v342, %v381
        %v405 = vsel %vm218, %v343, %v383
        %v406 = vsel %vm218, %v344, %v385
        %v407 = vsel %vm218, %v345, %v387
        %v408 = vsel %vm218, %v346, %v389
        %v409 = vsel %vm218, %v347, %v391
        %v410 = vsel %vm218, %v348, %v393
        %v411 = vsel %vm218, %v349, %v395
        %412 = vrot.lane.b32.xlu0 %v342, 127
        %v413 = vpop.permute.xlu0 %412
        %414 = vrot.lane.b32.xlu0 %v343, 127
        %v415 = vpop.permute.xlu0 %414
        %416 = vrot.lane.b32.xlu0 %v344, 127
        %v417 = vpop.permute.xlu0 %416
        %418 = vrot.lane.b32.xlu0 %v345, 127
        %v419 = vpop.permute.xlu0 %418
        %420 = vrot.lane.b32.xlu0 %v346, 127
        %v421 = vpop.permute.xlu0 %420
        %422 = vrot.lane.b32.xlu0 %v347, 127
        %v423 = vpop.permute.xlu0 %422
        %424 = vrot.lane.b32.xlu0 %v348, 127
        %v425 = vpop.permute.xlu0 %424
        %426 = vrot.lane.b32.xlu0 %v349, 127
        %v427 = vpop.permute.xlu0 %426
        %v436 = vsel %vm251, %v413, %v342
        %v437 = vsel %vm251, %v415, %v343
        %v438 = vsel %vm251, %v417, %v344
        %v439 = vsel %vm251, %v419, %v345
        %v440 = vsel %vm251, %v421, %v346
        %v441 = vsel %vm251, %v423, %v347
        %v442 = vsel %vm251, %v425, %v348
        %v443 = vsel %vm251, %v427, %v349
        %v444 = vmax.f32 %v404, %v436
        %v445 = vmax.f32 %v405, %v437
        %v446 = vmax.f32 %v406, %v438
        %v447 = vmax.f32 %v407, %v439
        %v448 = vmax.f32 %v408, %v440
        %v449 = vmax.f32 %v409, %v441
        %v450 = vmax.f32 %v410, %v442
        %v451 = vmax.f32 %v411, %v443
        %v452 = vmax.f32 %v342, %v444
        %v453 = vmax.f32 %v343, %v445
        %v454 = vmax.f32 %v344, %v446
        %v455 = vmax.f32 %v345, %v447
        %v456 = vmax.f32 %v346, %v448
        %v457 = vmax.f32 %v347, %v449
        %v458 = vmax.f32 %v348, %v450
        %v459 = vmax.f32 %v349, %v451
        %v468 = vrot.slane %v452, 7
        %v469 = vrot.slane %v453, 7
        %v470 = vsel %vm284, %v468, %v469
        %v471 = vrot.slane %v454, 7
        %v472 = vrot.slane %v455, 7
        %v473 = vsel %vm284, %v471, %v472
        %v474 = vrot.slane %v456, 7
        %v475 = vrot.slane %v457, 7
        %v476 = vsel %vm284, %v474, %v475
        %v477 = vrot.slane %v458, 7
        %v478 = vrot.slane %v459, 7
        %v479 = vsel %vm284, %v477, %v478
        %v488 = vsel %vm284, %v452, %v468
        %v489 = vsel %vm284, %v454, %v471
        %v490 = vsel %vm284, %v456, %v474
        %v491 = vsel %vm284, %v458, %v477
        %v492 = vrot.slane %v452, 1
        %v493 = vrot.slane %v453, 1
        %v494 = vsel %vm309, %v492, %v493
        %v495 = vrot.slane %v454, 1
        %v496 = vrot.slane %v455, 1
        %v497 = vsel %vm309, %v495, %v496
        %v498 = vrot.slane %v456, 1
        %v499 = vrot.slane %v457, 1
        %v500 = vsel %vm309, %v498, %v499
        %v501 = vrot.slane %v458, 1
        %v502 = vrot.slane %v459, 1
        %v503 = vsel %vm309, %v501, %v502
        %v512 = vsel %vm309, %v493, %v453
        %v513 = vsel %vm309, %v496, %v455
        %v514 = vsel %vm309, %v499, %v457
        %v515 = vsel %vm309, %v502, %v459
        %v516 = vmax.f32 %v488, %v494
        %v517 = vmax.f32 %v470, %v512
        %v518 = vmax.f32 %v489, %v497
        %v519 = vmax.f32 %v473, %v513
        %v520 = vmax.f32 %v490, %v500
        %v521 = vmax.f32 %v476, %v514
        %v522 = vmax.f32 %v491, %v503
        %v523 = vmax.f32 %v479, %v515
        %v524 = vmax.f32 %v452, %v516
        %v525 = vmax.f32 %v453, %v517
        %v526 = vmax.f32 %v454, %v518
        %v527 = vmax.f32 %v455, %v519
        %v528 = vmax.f32 %v456, %v520
        %v529 = vmax.f32 %v457, %v521
        %v530 = vmax.f32 %v458, %v522
        %v531 = vmax.f32 %v459, %v523
        %v532 = vand.u32 2147483647, %v524
        %v533 = vand.u32 2147483647, %v525
        %v534 = vand.u32 2147483647, %v526
        %v535 = vand.u32 2147483647, %v527
        %v536 = vand.u32 2147483647, %v528
        %v537 = vand.u32 2147483647, %v529
        %v538 = vand.u32 2147483647, %v530
        %v539 = vand.u32 2147483647, %v531
        %v540 = vsel %vm171, %v532, -inf
        %v541 = vsel %vm171, %v534, -inf
        %v542 = vsel %vm171, %v536, -inf
        %v543 = vmax.f32 %v540, %v542
        %v544 = vsel %vm171, %v538, -inf
        %v545 = vmax.f32 %v541, %v544
        %v546 = vmax.f32 %v543, %v545
        %v547 = vsel %vm171, %v533, -inf
        %v548 = vsel %vm171, %v535, -inf
        %v549 = vsel %vm171, %v537, -inf
        %v550 = vmax.f32 %v547, %v549
        %v551 = vsel %vm171, %v539, -inf
        %v552 = vmax.f32 %v548, %v551
        %v553 = vmax.f32 %v550, %v552
        %p554 = scmp.eq.s32.totalorder %s23, 0
        // Predicated region
        $region29: #{spp_layer.1} parent=23 // pred_check
          %p555 = pneg %p554
        $region30: #{spp_layer.1} parent=23 // pred_check_branch
          %557 = sbr.rel (%p555) target = $region32
        $region31: #{spp_layer.1} parent=23 // pred_region
          %558 = vst.msk [vmem:[#allocation2] sm:$0xff] %vm171, %v178
          %559 = vst.msk [vmem:[#allocation2 + $0x8] sm:$0xff] %vm171, %v185
          %560 = vst.msk [vmem:[#allocation3] sm:$0xff] %vm171, %v364
          %561 = vst.msk [vmem:[#allocation3 + $0x8] sm:$0xff] %vm171, %v371
          %562 = vst.msk [vmem:[#allocation4] sm:$0xff] %vm171, %v546
          %563 = vst.msk [vmem:[#allocation4 + $0x8] sm:$0xff] %vm171, %v553
        $region32: #{spp_layer.1} parent=23 // pred_fallthru
          _
        %p564 = scmp.gt.s32.totalorder %s23, 0
        // Predicated region
        $region33: #{spp_layer.1} parent=23 // pred_check
          %p565 = pneg %p564
        $region34: #{spp_layer.1} parent=23 // pred_check_branch
          %567 = sbr.rel (%p565) target = $region36
        $region35: #{spp_layer.1} parent=23 // pred_region
          %v568 = vld [vmem:[#allocation2] sm:$0xff]
          %v569 = vld [vmem:[#allocation2 + $0x8] sm:$0xff]
          %v570 = vmax.f32 %v568, %v178
          %v571 = vmax.f32 %v569, %v185
          %572 = vst.msk [vmem:[#allocation2] sm:$0xff] %vm171, %v570
          %573 = vst.msk [vmem:[#allocation2 + $0x8] sm:$0xff] %vm171, %v571
          %v574 = vld [vmem:[#allocation3] sm:$0xff]
          %v575 = vld [vmem:[#allocation3 + $0x8] sm:$0xff]
          %v576 = vmax.f32 %v574, %v364
          %v577 = vmax.f32 %v575, %v371
          %578 = vst.msk [vmem:[#allocation3] sm:$0xff] %vm171, %v576
          %579 = vst.msk [vmem:[#allocation3 + $0x8] sm:$0xff] %vm171, %v577
          %v580 = vld [vmem:[#allocation4] sm:$0xff]
          %v581 = vld [vmem:[#allocation4 + $0x8] sm:$0xff]
          %v582 = vmax.f32 %v580, %v546
          %v583 = vmax.f32 %v581, %v553
          %584 = vst.msk [vmem:[#allocation4] sm:$0xff] %vm171, %v582
          %585 = vst.msk [vmem:[#allocation4 + $0x8] sm:$0xff] %vm171, %v583
        $region36: #{spp_layer.1} parent=23 // pred_fallthru
          _
        // Predicated region
        $region37: #{spp_layer.1} parent=23 // pred_check
          %p586 = pneg %p554
        $region38: #{spp_layer.1} parent=23 // pred_check_branch
          %588 = sbr.rel (%p586) target = $region40
        $region39: #{spp_layer.1} parent=23 // pred_region
          %v589 = vld [vmem:[#allocation2] sm:$0xff]
          %v590 = vld [vmem:[#allocation2 + $0x8] sm:$0xff]
          %v591 = vld [vmem:[#allocation3] sm:$0xff]
          %v592 = vld [vmem:[#allocation3 + $0x8] sm:$0xff]
          %v593 = vadd.f32 %v589, %v591
          %v594 = vadd.f32 %v590, %v592
          %v595 = vld [vmem:[#allocation4] sm:$0xff]
          %v596 = vld [vmem:[#allocation4 + $0x8] sm:$0xff]
          %v597 = vadd.f32 %v593, %v595
          %v598 = vadd.f32 %v594, %v596
          %599 = vst.msk [vmem:[%s153] sm:$0xff] %vm171, %v597
          %600 = vst.msk [vmem:[%s153 + $0x8] sm:$0xff] %vm171, %v598
        $region40: #{spp_layer.1} parent=23 // pred_fallthru
          _
        %s601 = sand.u32 %s66, 1
        %s602 = scalar_lea.sflag [#allocation7], %s601
        %s603 = sand.u32 %s66, 1
        %s604 = smul.addr %s603, 16
        %s605 = scalar_lea.vmem [#allocation8], %s604
        // Predicated region
        $region41: #{spp_layer.1} parent=23 // pred_check
          %p606 = pneg %p76
        $region42: #{spp_layer.1} parent=23 // pred_check_branch
          %608 = sbr.rel (%p606) target = $region44
        $region43: #{spp_layer.1} parent=23 // pred_region
          %610 = vsyncadd %s602, 0
          %s611 = smul.addr %s22, 2
          %s612 = smul.addr %s611, 8
          %s613 = scalar_lea.hbm %s1, %s612
          %s614 = sshll.u32 %s605, 4
          %s615 = int_to_ptr.vmem [resolvable:$true] %s614
          %s616 = sshll.u32 %s613, 4
          %s617 = int_to_ptr.hbm [resolvable:$true] %s616
          %622 = dma.vmem_to_hbm [thread:$0]  %s615, 256, %s617, %s602, 128, 128, 8
        $region44: #{spp_layer.1} parent=23 // pred_fallthru
          _
      $region24: #{spp_layer.1} parent=5 // pred_fallthru
        _
      %p623 = scmp.le.s32.totalorder 2, %s13
      // Predicated region
      $region45: #{spp_layer.1} parent=5 // pred_check
        %p624 = pneg %p623
      $region46: #{spp_layer.1} parent=5 // pred_check_branch
        %626 = sbr.rel (%p624) target = $region48
      $region47: #{spp_layer.1} parent=5 // pred_region
        %s627 = ssub.s32 %s13, 2
        // Predicated region
        $region49: #{spp_layer.1} parent=47 // pred_check
          %p628 = pneg %p82
        $region50: #{spp_layer.1} parent=47 // pred_check_branch
          %630 = sbr.rel (%p628) target = $region52
        $region51: #{spp_layer.1} parent=47 // pred_region
          %s631 = sand.u32 %s67, 1
          %s632 = scalar_lea.sflag [#allocation7], %s631
          %s633 = sand.u32 %s67, 1
          %s634 = smul.addr %s633, 16
          %s635 = scalar_lea.vmem [#allocation8], %s634
          %637 = dma.done %s632, 256
        $region52: #{spp_layer.1} parent=47 // pred_fallthru
          _
      $region48: #{spp_layer.1} parent=5 // pred_fallthru
        _
    $region6: #{spp_layer.1} parent=1 // loop_footer
      %s17 = sadd.s32 1, %s13
    $region7: #{spp_layer.1} parent=1 // loop_footer_branch
      %12 = sbr.rel target = $region3
    $region8: #{spp_layer.1} parent=1 // loop_exit
      _
    %638 = vsyncpa [#allocation6], 1
    %s639 = scalar_lea.sflag [#allocation6], 1
    %640 = vsyncpa %s639, 1
    %641 = vsyncpa [#allocation7], 1
    %s642 = scalar_lea.sflag [#allocation7], 1
    %643 = vsyncpa %s642, 1

</llo_original>
